<compile_context>
chip_gen: v7x
topology: tpu7x:2x2x1
jax: 0.10.0
libtpu: 0.0.40
codegen_flags: <defaults>
</compile_context>

<pallas_src>
import functools

import jax
import jax.numpy as jnp
from jax.experimental import pallas as pl
from jax.experimental.pallas import tpu as pltpu


def dense_l4_kernel(hs1_ref, hs2_ref, hs3_ref, hs4_ref, w_ref, b_ref,
                    out_ref, acc_ref, *, seq_len):
    # hs*_ref : (Bt, St, H)  tiles of the last four hidden states
    # w_ref   : (H, 1)       fc weight, repacked as (in, out)
    # b_ref   : (1, 1)       fc bias
    # out_ref : (Bt, 1)
    # acc_ref : (Bt, H)      running sum over stack & sequence (f32 VMEM)
    s_idx = pl.program_id(1)

    @pl.when(s_idx == 0)
    def _init():
        acc_ref[...] = jnp.zeros_like(acc_ref)

    # Sum of the four hidden states for this tile (VPU adds) reduced over the
    # sequence tile (one sublane reduce) into the per-batch accumulator.
    x = hs1_ref[...] + hs2_ref[...] + hs3_ref[...] + hs4_ref[...]   # (Bt, St, H)
    acc_ref[...] += jnp.sum(x, axis=1)                               # (Bt, H)

    @pl.when(s_idx == pl.num_programs(1) - 1)
    def _finalize():
        scale = 1.0 / (4.0 * seq_len)
        pooled = acc_ref[...] * scale                                # (Bt, H) == mean(stack, seq)
        out_ref[...] = (jnp.dot(pooled, w_ref[...],
                                preferred_element_type=jnp.float32)
                        + b_ref[...])                                # (Bt, 1)


def dense_l4_forward(hs1, hs2, hs3, hs4, fc_w, fc_b, *, bt=None, st=None):
    """hs1..hs4: (B, S, H) f32 (hs[-1]..hs[-4]); fc_w: (1, H); fc_b: (1,).

    Returns (B, 1) f32, matching DenseModel_l4.forward.
    """
    B, S, H = hs1.shape
    bt = B if bt is None else min(bt, B)
    st = S if st is None else min(st, S)
    assert B % bt == 0 and S % st == 0, "choose bt | B and st | S"

    # Repack fc params for the kernel: (in, out) weight and 2-D bias.
    w = fc_w.T.reshape(H, 1).astype(jnp.float32)
    b = fc_b.reshape(1, 1).astype(jnp.float32)

    hs_spec = pl.BlockSpec((bt, st, H), lambda i, j: (i, j, 0))
    kernel = functools.partial(dense_l4_kernel, seq_len=S)

    return pl.pallas_call(
        kernel,
        out_shape=jax.ShapeDtypeStruct((B, 1), jnp.float32),
        grid_spec=pltpu.PrefetchScalarGridSpec(
            num_scalar_prefetch=0,
            grid=(B // bt, S // st),
            in_specs=[
                hs_spec, hs_spec, hs_spec, hs_spec,
                pl.BlockSpec((H, 1), lambda i, j: (0, 0)),   # fc weight (constant)
                pl.BlockSpec((1, 1), lambda i, j: (0, 0)),   # fc bias   (constant)
            ],
            out_specs=pl.BlockSpec((bt, 1), lambda i, j: (i, 0)),
            scratch_shapes=[pltpu.VMEM((bt, H), jnp.float32)],
        ),
        compiler_params=pltpu.CompilerParams(
            dimension_semantics=("parallel", "arbitrary")),
    )(hs1, hs2, hs3, hs4, w, b)


def reference_forward(hs1, hs2, hs3, hs4, fc_w, fc_b):
    """Pure-JAX reference mirroring the PyTorch module."""
    x = jnp.stack([hs1, hs2, hs3, hs4])      # (4, B, S, H)
    x = jnp.mean(x, axis=(0, 2))             # (B, H)
    return x @ fc_w.T + fc_b[None, :]        # (B, 1)


if __name__ == "__main__":
    # Small synthetic shapes (roberta-large would be H=1024, S=256).
    B, S, H = 2, 16, 32

    key = jax.random.PRNGKey(0)
    k1, k2, k3, k4, kw, kb = jax.random.split(key, 6)

    hs_m1 = jax.random.normal(k1, (B, S, H), dtype=jnp.float32)   # hs[-1]
    hs_m2 = jax.random.normal(k2, (B, S, H), dtype=jnp.float32)   # hs[-2]
    hs_m3 = jax.random.normal(k3, (B, S, H), dtype=jnp.float32)   # hs[-3]
    hs_m4 = jax.random.normal(k4, (B, S, H), dtype=jnp.float32)   # hs[-4]

    # fc init matching the module: weight std=0.02, bias ~ normal.
    fc_w = 0.02 * jax.random.normal(kw, (1, H), dtype=jnp.float32)
    fc_b = jax.random.normal(kb, (1,), dtype=jnp.float32)

    # st=8 -> grid (1, 2): exercises the sequence-axis accumulator path.
    out = dense_l4_forward(hs_m1, hs_m2, hs_m3, hs_m4, fc_w, fc_b, st=8)
    out = jax.block_until_ready(out)

    ref = reference_forward(hs_m1, hs_m2, hs_m3, hs_m4, fc_w, fc_b)
    ref = jax.block_until_ready(ref)

    assert out.shape == (B, 1), out.shape
    assert jnp.allclose(out, ref, atol=1e-4, rtol=1e-4), (out, ref)
    print("KERNEL_OK")
</pallas_src>

<mosaic_0001>
module attributes {stable_mosaic.version = 11 : i64} {
  func.func @dense_l4_kernel(%arg0: i32, %arg1: i32, %arg2: memref<2x8x32xf32, #tpu.memory_space<vmem>>, %arg3: memref<2x8x32xf32, #tpu.memory_space<vmem>>, %arg4: memref<2x8x32xf32, #tpu.memory_space<vmem>>, %arg5: memref<2x8x32xf32, #tpu.memory_space<vmem>>, %arg6: memref<32x1xf32, #tpu.memory_space<vmem>>, %arg7: memref<1x1xf32, #tpu.memory_space<vmem>>, %arg8: memref<2x1xf32, #tpu.memory_space<vmem>>, %arg9: memref<2x32xf32, #tpu.memory_space<vmem>>) attributes {dimension_semantics = [#tpu.dimension_semantics<parallel>, #tpu.dimension_semantics<arbitrary>], iteration_bounds = array<i64: 1, 2>, scalar_prefetch = 0 : i64, scratch_operands = 1 : i64, tpu.core_type = #tpu.core_type<tc>, window_params = [{transform_indices = @transform_0, window_bounds = array<i64: 2, 8, 32>}, {transform_indices = @transform_1, window_bounds = array<i64: 2, 8, 32>}, {transform_indices = @transform_2, window_bounds = array<i64: 2, 8, 32>}, {transform_indices = @transform_3, window_bounds = array<i64: 2, 8, 32>}, {pipeline_mode = #tpu.pipeline_mode<synchronous>, transform_indices = @transform_4, window_bounds = array<i64: 32, 1>}, {pipeline_mode = #tpu.pipeline_mode<synchronous>, transform_indices = @transform_5, window_bounds = array<i64: 1, 1>}, {transform_indices = @transform_6, window_bounds = array<i64: 2, 1>}]} {
    %c0_i32 = arith.constant 0 : i32
    %0 = arith.cmpi eq, %arg1, %c0_i32 : i32
    %1 = arith.extui %0 : i1 to i32
    %c0_i32_0 = arith.constant 0 : i32
    %2 = arith.cmpi ne, %1, %c0_i32_0 : i32
    scf.if %2 {
      %cst_17 = arith.constant 0.000000e+00 : f32
      %17 = vector.broadcast %cst_17 : f32 to vector<2x32xf32>
      %c0_18 = arith.constant 0 : index
      %c0_19 = arith.constant 0 : index
      %18 = vector.load %arg9[%c0_18, %c0_19] : memref<2x32xf32, #tpu.memory_space<vmem>>, vector<2x32xf32>
      tpu.vector_store %arg9[%c0_18, %c0_19], %17 {strides = array<i32>} : memref<2x32xf32, #tpu.memory_space<vmem>>, vector<2x32xf32>,
    } else {
    }
    %c0 = arith.constant 0 : index
    %c0_1 = arith.constant 0 : index
    %c0_2 = arith.constant 0 : index
    %3 = vector.load %arg2[%c0, %c0_1, %c0_2] : memref<2x8x32xf32, #tpu.memory_space<vmem>>, vector<2x8x32xf32>
    %c0_3 = arith.constant 0 : index
    %c0_4 = arith.constant 0 : index
    %c0_5 = arith.constant 0 : index
    %4 = vector.load %arg3[%c0_3, %c0_4, %c0_5] : memref<2x8x32xf32, #tpu.memory_space<vmem>>, vector<2x8x32xf32>
    %5 = arith.addf %3, %4 : vector<2x8x32xf32>
    %c0_6 = arith.constant 0 : index
    %c0_7 = arith.constant 0 : index
    %c0_8 = arith.constant 0 : index
    %6 = vector.load %arg4[%c0_6, %c0_7, %c0_8] : memref<2x8x32xf32, #tpu.memory_space<vmem>>, vector<2x8x32xf32>
    %7 = arith.addf %5, %6 : vector<2x8x32xf32>
    %c0_9 = arith.constant 0 : index
    %c0_10 = arith.constant 0 : index
    %c0_11 = arith.constant 0 : index
    %8 = vector.load %arg5[%c0_9, %c0_10, %c0_11] : memref<2x8x32xf32, #tpu.memory_space<vmem>>, vector<2x8x32xf32>
    %9 = arith.addf %7, %8 : vector<2x8x32xf32>
    %c0_12 = arith.constant 0 : index
    %c0_13 = arith.constant 0 : index
    %10 = vector.load %arg9[%c0_12, %c0_13] : memref<2x32xf32, #tpu.memory_space<vmem>>, vector<2x32xf32>
    %cst = arith.constant dense<0.000000e+00> : vector<2x32xf32>
    %11 = vector.multi_reduction <add>, %9, %cst [1] : vector<2x8x32xf32> to vector<2x32xf32>
    %12 = arith.addf %10, %11 : vector<2x32xf32>
    %c0_14 = arith.constant 0 : index
    %c0_15 = arith.constant 0 : index
    %13 = vector.load %arg9[%c0_14, %c0_15] : memref<2x32xf32, #tpu.memory_space<vmem>>, vector<2x32xf32>
    tpu.vector_store %arg9[%c0_14, %c0_15], %12 {strides = array<i32>} : memref<2x32xf32, #tpu.memory_space<vmem>>, vector<2x32xf32>,
    %c1_i32 = arith.constant 1 : i32
    %14 = arith.cmpi eq, %arg1, %c1_i32 : i32
    %15 = arith.extui %14 : i1 to i32
    %c0_i32_16 = arith.constant 0 : i32
    %16 = arith.cmpi ne, %15, %c0_i32_16 : i32
    scf.if %16 {
      %c0_17 = arith.constant 0 : index
      %c0_18 = arith.constant 0 : index
      %17 = vector.load %arg9[%c0_17, %c0_18] : memref<2x32xf32, #tpu.memory_space<vmem>>, vector<2x32xf32>
      %cst_19 = arith.constant 1.562500e-02 : f32
      %18 = vector.broadcast %cst_19 : f32 to vector<2x32xf32>
      %19 = arith.mulf %17, %18 : vector<2x32xf32>
      %c0_20 = arith.constant 0 : index
      %c0_21 = arith.constant 0 : index
      %20 = vector.load %arg6[%c0_20, %c0_21] : memref<32x1xf32, #tpu.memory_space<vmem>>, vector<32x1xf32>
      %cst_22 = arith.constant dense<0.000000e+00> : vector<2x1xf32>
      %21 = tpu.matmul %19, %20, %cst_22 {dimension_numbers = #tpu.dot_dimension_numbers<[1], [0], [0], [1], [0, 0, 1, 1], [], []>} : vector<2x32xf32>, vector<32x1xf32>, vector<2x1xf32> -> vector<2x1xf32>
      %c0_23 = arith.constant 0 : index
      %c0_24 = arith.constant 0 : index
      %22 = vector.load %arg7[%c0_23, %c0_24] : memref<1x1xf32, #tpu.memory_space<vmem>>, vector<1x1xf32>
      %23 = vector.broadcast %22 : vector<1x1xf32> to vector<2x1xf32>
      %24 = arith.addf %21, %23 : vector<2x1xf32>
      %c0_25 = arith.constant 0 : index
      %c0_26 = arith.constant 0 : index
      %25 = vector.load %arg8[%c0_25, %c0_26] : memref<2x1xf32, #tpu.memory_space<vmem>>, vector<2x1xf32>
      tpu.vector_store %arg8[%c0_25, %c0_26], %24 {strides = array<i32>} : memref<2x1xf32, #tpu.memory_space<vmem>>, vector<2x1xf32>,
    } else {
    }
    return
  }
  func.func @transform_0(%arg0: i32, %arg1: i32) -> (i32, i32, i32) {
    %c0_i32 = arith.constant 0 : i32
    %c0_i32_0 = arith.constant 0 : i32
    return %arg0, %arg1, %c0_i32 : i32, i32, i32
  }
  func.func @transform_1(%arg0: i32, %arg1: i32) -> (i32, i32, i32) {
    %c0_i32 = arith.constant 0 : i32
    %c0_i32_0 = arith.constant 0 : i32
    return %arg0, %arg1, %c0_i32 : i32, i32, i32
  }
  func.func @transform_2(%arg0: i32, %arg1: i32) -> (i32, i32, i32) {
    %c0_i32 = arith.constant 0 : i32
    %c0_i32_0 = arith.constant 0 : i32
    return %arg0, %arg1, %c0_i32 : i32, i32, i32
  }
  func.func @transform_3(%arg0: i32, %arg1: i32) -> (i32, i32, i32) {
    %c0_i32 = arith.constant 0 : i32
    %c0_i32_0 = arith.constant 0 : i32
    return %arg0, %arg1, %c0_i32 : i32, i32, i32
  }
  func.func @transform_4(%arg0: i32, %arg1: i32) -> (i32, i32) {
    %c0_i32 = arith.constant 0 : i32
    %c0_i32_0 = arith.constant 0 : i32
    %c0_i32_1 = arith.constant 0 : i32
    return %c0_i32, %c0_i32_0 : i32, i32
  }
  func.func @transform_5(%arg0: i32, %arg1: i32) -> (i32, i32) {
    %c0_i32 = arith.constant 0 : i32
    %c0_i32_0 = arith.constant 0 : i32
    %c0_i32_1 = arith.constant 0 : i32
    return %c0_i32, %c0_i32_0 : i32, i32
  }
  func.func @transform_6(%arg0: i32, %arg1: i32) -> (i32, i32) {
    %c0_i32 = arith.constant 0 : i32
    %c0_i32_0 = arith.constant 0 : i32
    return %arg0, %c0_i32 : i32, i32
  }
}

</mosaic_0001>

<llo_original>
// kernel: tpu_custom_call.1
$region0: #{tpu_custom_call.1}
  #allocation0 [shape = 'u32[]', space=smem, size = 0x4, offset = 0x4, fixed_abs, tag = 'smem constant byte address 0x4 - core index']
  #allocation1 [shape = 'u32[144,128]{1,0:T(1,128)}', space=vmem, size = 0x12000, scoped, tag = 'internal scratch']
  #allocation2 [shape = 'f32[2,32]{1,0:T(2,128)}', space=vmem, size = 0x400, scoped, tag = 'scratch operand']
  #allocation3 [shape = 'f32[1,1]{1,0:T(1,128)S(1)}', space=vmem, size = 0x200, scoped, tag = 'scoped memory for tpu_custom_call.1']
  %s0 = inlined_call_operand.vmem [shape: f32[2,16,32], index: 0, kind: input, shape index: {}]
  %s1 = inlined_call_operand.hbm [shape: f32[2,16,32], index: 1, kind: input, shape index: {}]
  %s2 = inlined_call_operand.hbm [shape: f32[2,16,32], index: 2, kind: input, shape index: {}]
  %s3 = inlined_call_operand.hbm [shape: f32[2,16,32], index: 3, kind: input, shape index: {}]
  %s4 = inlined_call_operand.vmem [shape: f32[32,1], index: 4, kind: input, shape index: {}]
  %s5 = inlined_call_operand.<no memory space> [shape: f32[1,1], index: 5, kind: input, shape index: {}]
  %s6 = inlined_call_operand.vmem [shape: f32[2,1], index: 6, kind: output, shape index: {}]
  %s7 = sld [smem:[#allocation0]]
  $region115: #{tpu_custom_call.1} parent=0
    _
  %s9 = ssub.s32 1, %s7
  %s10 = scalar_select 0, %s9, %s7
  %v11 = vstv %s5
  %12 = vst [vmem:[#allocation3] sm:$0x1] %v11
  $region1: #{tpu_custom_call.1} parent=0
    #allocation4 [shape = 'u8[16384]{0}', space=vmem, size = 0x4000, scoped, tag = 'input window, operand 0']
    #allocation5 [shape = 'u8[16384]{0}', space=vmem, size = 0x4000, scoped, tag = 'input window, operand 1']
    #allocation6 [shape = 's32[2]{0}', space=sflag, size = 0x8, scoped, tag = 'scoped memory for tpu_custom_call.1']
    #allocation7 [shape = 'u8[16384]{0}', space=vmem, size = 0x4000, scoped, tag = 'input window, operand 2']
    #allocation8 [shape = 's32[2]{0}', space=sflag, size = 0x8, scoped, tag = 'scoped memory for tpu_custom_call.1']
    #allocation9 [shape = 'u8[16384]{0}', space=vmem, size = 0x4000, scoped, tag = 'input window, operand 3']
    %13 = vsyncpa [#allocation6], 0
    %s14 = scalar_lea.sflag [#allocation6], 1
    %15 = vsyncpa %s14, 0
    %16 = vsyncpa [#allocation8], 0
    %s17 = scalar_lea.sflag [#allocation8], 1
    %18 = vsyncpa %s17, 0
    loop: start=0, step=1, limit=4
    $region2: #{tpu_custom_call.1} parent=1 // loop_pre_header
      _
    $region3: #{tpu_custom_call.1} parent=1 // loop_header
      %s20 = sphi 0, %s24
      %p21 = scmp.ge.s32.totalorder %s20, 4
      %s27 = sphi 0, %s39
      %s28 = sphi 0, %s35
      %s29 = sphi 0, %s27
      %s30 = sphi 0, %s28
      %s31 = sphi 0, %s29
      %s32 = sphi 0, %s30
      %s44 = sphi 0, %s46
      %s47 = sphi 0, %s44
      %s48 = sphi 0, %s47
      %s64 = sphi 0, %s48
      %s72 = sphi 0, %s74
      %s75 = sphi 0, %s72
      %s76 = sphi 0, %s75
      %s92 = sphi 0, %s76
      %s100 = sphi 0, %s102
      %s103 = sphi 0, %s100
      %s104 = sphi 0, %s103
      %s120 = sphi 0, %s104
      %s128 = sphi 0, %s130
      %s131 = sphi 0, %s128
      %s132 = sphi 0, %s131
      %s148 = sphi 0, %s132
      %s152 = sphi 0, %s152
      %s154 = sphi 0, %s152
      %s155 = sphi 0, %s154
      %s169 = sphi 0, %s155
      %s173 = sphi 0, %s173
      %s175 = sphi 0, %s173
      %s176 = sphi 0, %s175
      %s190 = sphi 0, %s176
      %s196 = sphi 0, %s198
      %s199 = sphi 0, %s196
      %s200 = sphi 0, %s199
      %s216 = sphi 0, %s200
    $region4: #{tpu_custom_call.1} parent=1 // loop_header_branch
      %23 = sbr.rel (%p21) target = $region8
    $region5: #{tpu_custom_call.1} parent=1 // loop_body
      %s25 = ssub.s32 %s20, 1
      %s26 = ssub.s32 %s20, 2
      %s33 = sadd.s32 1, %s28
      %p34 = scmp.ge.s32.totalorder %s33, 2
      %s35 = scalar_select %p34, 0, %s33
      %s36 = sadd.s32 1, %s27
      %s37 = scalar_select %p34, %s36, %s27
      %p38 = scmp.ge.s32.totalorder %s37, 1
      %s39 = scalar_select %p38, 0, %s37
      %s40 = ssub.s32 %s27, %s39
      %s41 = ssub.s32 %s28, %s35
      %s42 = sor.u32 %s40, %s41
      %p43 = scmp.eq.s32.totalorder %s42, 0
      %s45 = sadd.s32 %s44, 1
      %s46 = scalar_select %p43, %s44, %s45
      %p49 = pneg %p43
      %p50 = scmp.eq.s32.totalorder %s20, 1
      %p51 = por %p49, %p50
      %p52 = scmp.ne.s32.totalorder %s44, %s47
      %p53 = scmp.eq.s32.totalorder %s20, 0
      %p54 = por %p52, %p53
      %p55 = scmp.ne.s32.totalorder %s44, %s47
      %p56 = scmp.eq.s32.totalorder %s25, 1
      %p57 = por %p55, %p56
      %p58 = scmp.ne.s32.totalorder %s47, %s48
      %p59 = scmp.eq.s32.totalorder %s25, 0
      %p60 = por %p58, %p59
      %p61 = scmp.ne.s32.totalorder %s47, %s48
      %p62 = scmp.eq.s32.totalorder %s26, 1
      %p63 = por %p61, %p62
      %p65 = scmp.ne.s32.totalorder %s48, %s64
      %p66 = scmp.eq.s32.totalorder %s26, 0
      %p67 = por %p65, %p66
      %s68 = ssub.s32 %s27, %s39
      %s69 = ssub.s32 %s28, %s35
      %s70 = sor.u32 %s68, %s69
      %p71 = scmp.eq.s32.totalorder %s70, 0
      %s73 = sadd.s32 %s72, 1
      %s74 = scalar_select %p71, %s72, %s73
      %p77 = pneg %p71
      %p78 = scmp.eq.s32.totalorder %s20, 1
      %p79 = por %p77, %p78
      %p80 = scmp.ne.s32.totalorder %s72, %s75
      %p81 = scmp.eq.s32.totalorder %s20, 0
      %p82 = por %p80, %p81
      %p83 = scmp.ne.s32.totalorder %s72, %s75
      %p84 = scmp.eq.s32.totalorder %s25, 1
      %p85 = por %p83, %p84
      %p86 = scmp.ne.s32.totalorder %s75, %s76
      %p87 = scmp.eq.s32.totalorder %s25, 0
      %p88 = por %p86, %p87
      %p89 = scmp.ne.s32.totalorder %s75, %s76
      %p90 = scmp.eq.s32.totalorder %s26, 1
      %p91 = por %p89, %p90
      %p93 = scmp.ne.s32.totalorder %s76, %s92
      %p94 = scmp.eq.s32.totalorder %s26, 0
      %p95 = por %p93, %p94
      %s96 = ssub.s32 %s27, %s39
      %s97 = ssub.s32 %s28, %s35
      %s98 = sor.u32 %s96, %s97
      %p99 = scmp.eq.s32.totalorder %s98, 0
      %s101 = sadd.s32 %s100, 1
      %s102 = scalar_select %p99, %s100, %s101
      %p105 = pneg %p99
      %p106 = scmp.eq.s32.totalorder %s20, 1
      %p107 = por %p105, %p106
      %p108 = scmp.ne.s32.totalorder %s100, %s103
      %p109 = scmp.eq.s32.totalorder %s20, 0
      %p110 = por %p108, %p109
      %p111 = scmp.ne.s32.totalorder %s100, %s103
      %p112 = scmp.eq.s32.totalorder %s25, 1
      %p113 = por %p111, %p112
      %p114 = scmp.ne.s32.totalorder %s103, %s104
      %p115 = scmp.eq.s32.totalorder %s25, 0
      %p116 = por %p114, %p115
      %p117 = scmp.ne.s32.totalorder %s103, %s104
      %p118 = scmp.eq.s32.totalorder %s26, 1
      %p119 = por %p117, %p118
      %p121 = scmp.ne.s32.totalorder %s104, %s120
      %p122 = scmp.eq.s32.totalorder %s26, 0
      %p123 = por %p121, %p122
      %s124 = ssub.s32 %s27, %s39
      %s125 = ssub.s32 %s28, %s35
      %s126 = sor.u32 %s124, %s125
      %p127 = scmp.eq.s32.totalorder %s126, 0
      %s129 = sadd.s32 %s128, 1
      %s130 = scalar_select %p127, %s128, %s129
      %p133 = pneg %p127
      %p134 = scmp.eq.s32.totalorder %s20, 1
      %p135 = por %p133, %p134
      %p136 = scmp.ne.s32.totalorder %s128, %s131
      %p137 = scmp.eq.s32.totalorder %s20, 0
      %p138 = por %p136, %p137
      %p139 = scmp.ne.s32.totalorder %s128, %s131
      %p140 = scmp.eq.s32.totalorder %s25, 1
      %p141 = por %p139, %p140
      %p142 = scmp.ne.s32.totalorder %s131, %s132
      %p143 = scmp.eq.s32.totalorder %s25, 0
      %p144 = por %p142, %p143
      %p145 = scmp.ne.s32.totalorder %s131, %s132
      %p146 = scmp.eq.s32.totalorder %s26, 1
      %p147 = por %p145, %p146
      %p149 = scmp.ne.s32.totalorder %s132, %s148
      %p150 = scmp.eq.s32.totalorder %s26, 0
      %p151 = por %p149, %p150
      %s153 = sadd.s32 %s152, 1
      %p156 = scmp.eq.s32.totalorder %s20, 1
      %p157 = scmp.ne.s32.totalorder %s152, %s154
      %p158 = scmp.eq.s32.totalorder %s20, 0
      %p159 = por %p157, %p158
      %p160 = scmp.ne.s32.totalorder %s152, %s154
      %p161 = scmp.eq.s32.totalorder %s25, 1
      %p162 = por %p160, %p161
      %p163 = scmp.ne.s32.totalorder %s154, %s155
      %p164 = scmp.eq.s32.totalorder %s25, 0
      %p165 = por %p163, %p164
      %p166 = scmp.ne.s32.totalorder %s154, %s155
      %p167 = scmp.eq.s32.totalorder %s26, 1
      %p168 = por %p166, %p167
      %p170 = scmp.ne.s32.totalorder %s155, %s169
      %p171 = scmp.eq.s32.totalorder %s26, 0
      %p172 = por %p170, %p171
      %s174 = sadd.s32 %s173, 1
      %p177 = scmp.eq.s32.totalorder %s20, 1
      %p178 = scmp.ne.s32.totalorder %s173, %s175
      %p179 = scmp.eq.s32.totalorder %s20, 0
      %p180 = por %p178, %p179
      %p181 = scmp.ne.s32.totalorder %s173, %s175
      %p182 = scmp.eq.s32.totalorder %s25, 1
      %p183 = por %p181, %p182
      %p184 = scmp.ne.s32.totalorder %s175, %s176
      %p185 = scmp.eq.s32.totalorder %s25, 0
      %p186 = por %p184, %p185
      %p187 = scmp.ne.s32.totalorder %s175, %s176
      %p188 = scmp.eq.s32.totalorder %s26, 1
      %p189 = por %p187, %p188
      %p191 = scmp.ne.s32.totalorder %s176, %s190
      %p192 = scmp.eq.s32.totalorder %s26, 0
      %p193 = por %p191, %p192
      %s194 = ssub.s32 %s27, %s39
      %p195 = scmp.eq.s32.totalorder %s194, 0
      %s197 = sadd.s32 %s196, 1
      %s198 = scalar_select %p195, %s196, %s197
      %p201 = pneg %p195
      %p202 = scmp.eq.s32.totalorder %s20, 1
      %p203 = por %p201, %p202
      %p204 = scmp.ne.s32.totalorder %s196, %s199
      %p205 = scmp.eq.s32.totalorder %s20, 0
      %p206 = por %p204, %p205
      %p207 = scmp.ne.s32.totalorder %s196, %s199
      %p208 = scmp.eq.s32.totalorder %s25, 1
      %p209 = por %p207, %p208
      %p210 = scmp.ne.s32.totalorder %s199, %s200
      %p211 = scmp.eq.s32.totalorder %s25, 0
      %p212 = por %p210, %p211
      %p213 = scmp.ne.s32.totalorder %s199, %s200
      %p214 = scmp.eq.s32.totalorder %s26, 1
      %p215 = por %p213, %p214
      %p217 = scmp.ne.s32.totalorder %s200, %s216
      %p218 = scmp.eq.s32.totalorder %s26, 0
      %p219 = por %p217, %p218
      %p220 = scmp.le.s32.totalorder 1, %s20
      %p221 = scmp.lt.s32.totalorder %s20, 3
      %p222 = pnand %p220, %p221
      %p223 = pneg %p222
      // Predicated region
      $region9: #{tpu_custom_call.1} parent=5 // pred_check
        _
      $region10: #{tpu_custom_call.1} parent=5 // pred_check_branch
        %225 = sbr.rel (%p222) target = $region12
      $region11: #{tpu_custom_call.1} parent=5 // pred_region
        %s226 = ssub.s32 %s20, 1
        // Predicated region
        $region13: #{tpu_custom_call.1} parent=11 // pred_check
          %p227 = pneg %p165
        $region14: #{tpu_custom_call.1} parent=11 // pred_check_branch
          %229 = sbr.rel (%p227) target = $region16
        $region15: #{tpu_custom_call.1} parent=11 // pred_region
          _
        $region16: #{tpu_custom_call.1} parent=11 // pred_fallthru
          _
        // Predicated region
        $region17: #{tpu_custom_call.1} parent=11 // pred_check
          %p230 = pneg %p186
        $region18: #{tpu_custom_call.1} parent=11 // pred_check_branch
          %232 = sbr.rel (%p230) target = $region20
        $region19: #{tpu_custom_call.1} parent=11 // pred_region
          _
        $region20: #{tpu_custom_call.1} parent=11 // pred_fallthru
          _
      $region12: #{tpu_custom_call.1} parent=5 // pred_fallthru
        _
      %p233 = scmp.lt.s32.totalorder %s20, 2
      // Predicated region
      $region21: #{tpu_custom_call.1} parent=5 // pred_check
        %p234 = pneg %p233
      $region22: #{tpu_custom_call.1} parent=5 // pred_check_branch
        %236 = sbr.rel (%p234) target = $region24
      $region23: #{tpu_custom_call.1} parent=5 // pred_region
        // Predicated region
        $region25: #{tpu_custom_call.1} parent=23 // pred_check
          %p237 = pneg %p54
        $region26: #{tpu_custom_call.1} parent=23 // pred_check_branch
          %239 = sbr.rel (%p237) target = $region28
        $region27: #{tpu_custom_call.1} parent=23 // pred_region
          %s240 = sand.u32 %s44, 1
          %s241 = sand.u32 %s44, 1
          %s242 = smul.addr %s241, 16
          %s243 = scalar_lea.vmem [#allocation4], %s242
          %s244 = smul.u32 2, %s27
          %s245 = smul.addr %s244, 2
          %s246 = sadd.s32 %s28, %s245
          %s247 = smul.addr %s246, 8
          %s248 = scalar_lea.vmem %s0, %s247
          // Predicated region
          $region29: #{tpu_custom_call.1} parent=27 // pred_check
            _
          $region30: #{tpu_custom_call.1} parent=27 // pred_check_branch
            %250 = sbr.rel (0) target = $region32
          $region31: #{tpu_custom_call.1} parent=27 // pred_region
            // Predicated region
            $region33: #{tpu_custom_call.1} parent=31 // pred_check
              _
            $region34: #{tpu_custom_call.1} parent=31 // pred_check_branch
              %252 = sbr.rel (0) target = $region36
            $region35: #{tpu_custom_call.1} parent=31 // pred_region
              // Predicated region
              $region48: #{tpu_custom_call.1} parent=35 // pred_check
                _
              $region49: #{tpu_custom_call.1} parent=35 // pred_check_branch
                %269 = sbr.rel (0) target = $region51
              $region50: #{tpu_custom_call.1} parent=35 // pred_region
                loop: start=0, step=1, limit=1
                $region52: #{tpu_custom_call.1} parent=50 // loop_pre_header
                  _
                $region53: #{tpu_custom_call.1} parent=50 // loop_header
                  %s271 = sphi 0, %s275
                  %p272 = scmp.ge.s32.totalorder %s271, 1
                  %s276 = sphi %s248, %s248
                  %s277 = sphi %s243, %s243
                $region54: #{tpu_custom_call.1} parent=50 // loop_header_branch
                  %274 = sbr.rel (%p272) target = $region58
                $region55: #{tpu_custom_call.1} parent=50 // loop_body
                  %v278 = vld [vmem:[%s276] sm:$0xff]
                  %279 = vst [vmem:[%s277] sm:$0xff] %v278
                  %v280 = vld [vmem:[%s276 + $0x10] sm:$0xff]
                  %281 = vst [vmem:[%s277 + $0x8] sm:$0xff] %v280
                $region56: #{tpu_custom_call.1} parent=50 // loop_footer
                  %s275 = sadd.s32 1, %s271
                $region57: #{tpu_custom_call.1} parent=50 // loop_footer_branch
                  %270 = sbr.rel target = $region53
                $region58: #{tpu_custom_call.1} parent=50 // loop_exit
                  _
              $region51: #{tpu_custom_call.1} parent=35 // pred_fallthru
                _
              // Predicated region
              $region59: #{tpu_custom_call.1} parent=35 // pred_check
                _
              $region60: #{tpu_custom_call.1} parent=35 // pred_check_branch
                %283 = sbr.rel target = $region62
              $region61: #{tpu_custom_call.1} parent=35 // pred_region
                _
              $region62: #{tpu_custom_call.1} parent=35 // pred_fallthru
                _
            $region36: #{tpu_custom_call.1} parent=31 // pred_fallthru
              _
            // Predicated region
            $region37: #{tpu_custom_call.1} parent=31 // pred_check
              _
            $region38: #{tpu_custom_call.1} parent=31 // pred_check_branch
              %254 = sbr.rel target = $region40
            $region39: #{tpu_custom_call.1} parent=31 // pred_region
              loop: start=0, step=1, limit=1
              $region41: #{tpu_custom_call.1} parent=39 // loop_pre_header
                _
              $region42: #{tpu_custom_call.1} parent=39 // loop_header
                %s257 = sphi 0, %s261
                %p258 = scmp.ge.s32.totalorder %s257, 1
                %s262 = sphi %s248, %s248
                %s263 = sphi %s243, %s243
              $region43: #{tpu_custom_call.1} parent=39 // loop_header_branch
                %260 = sbr.rel (%p258) target = $region47
              $region44: #{tpu_custom_call.1} parent=39 // loop_body
                %v264 = vld [vmem:[%s262] sm:$0xff]
                %265 = vst [vmem:[%s263] sm:$0xff] %v264
                %v266 = vld [vmem:[%s262 + $0x10] sm:$0xff]
                %267 = vst [vmem:[%s263 + $0x8] sm:$0xff] %v266
              $region45: #{tpu_custom_call.1} parent=39 // loop_footer
                %s261 = sadd.s32 1, %s257
              $region46: #{tpu_custom_call.1} parent=39 // loop_footer_branch
                %256 = sbr.rel target = $region42
              $region47: #{tpu_custom_call.1} parent=39 // loop_exit
                _
            $region40: #{tpu_custom_call.1} parent=31 // pred_fallthru
              _
          $region32: #{tpu_custom_call.1} parent=27 // pred_fallthru
            _
          %284 = vnop
        $region28: #{tpu_custom_call.1} parent=23 // pred_fallthru
          _
        // Predicated region
        $region63: #{tpu_custom_call.1} parent=23 // pred_check
          %p285 = pneg %p82
        $region64: #{tpu_custom_call.1} parent=23 // pred_check_branch
          %287 = sbr.rel (%p285) target = $region66
        $region65: #{tpu_custom_call.1} parent=23 // pred_region
          %s288 = sand.u32 %s72, 1
          %s289 = scalar_lea.sflag [#allocation6], %s288
          %s290 = sand.u32 %s72, 1
          %s291 = smul.addr %s290, 16
          %s292 = scalar_lea.vmem [#allocation5], %s291
          %s293 = smul.u32 2, %s27
          %s295 = ssub.s32 256, 256
          %296 = vsyncadd %s289, %s295
          %s297 = smul.addr %s293, 2
          %s298 = sadd.s32 %s28, %s297
          %s299 = smul.addr %s298, 128
          %s300 = scalar_lea.hbm %s1, %s299
          %s301 = sshll.u32 %s292, 4
          %s302 = int_to_ptr.vmem [resolvable:$true] %s301
          %307 = dma.hbm_to_vmem [thread:$0]  %s300, 256, %s302, %s289, 256, 128, 8
        $region66: #{tpu_custom_call.1} parent=23 // pred_fallthru
          _
        // Predicated region
        $region67: #{tpu_custom_call.1} parent=23 // pred_check
          %p308 = pneg %p110
        $region68: #{tpu_custom_call.1} parent=23 // pred_check_branch
          %310 = sbr.rel (%p308) target = $region70
        $region69: #{tpu_custom_call.1} parent=23 // pred_region
          %s311 = sand.u32 %s20, 1
          %s312 = scalar_lea.sflag [#allocation8], %s311
          %s313 = sand.u32 %s100, 1
          %s314 = smul.addr %s313, 16
          %s315 = scalar_lea.vmem [#allocation7], %s314
          %s316 = smul.u32 2, %s27
          %s318 = ssub.s32 256, 256
          %319 = vsyncadd %s312, %s318
          %s320 = smul.addr %s316, 2
          %s321 = sadd.s32 %s28, %s320
          %s322 = smul.addr %s321, 128
          %s323 = scalar_lea.hbm %s2, %s322
          %s324 = sshll.u32 %s315, 4
          %s325 = int_to_ptr.vmem [resolvable:$true] %s324
          %330 = dma.hbm_to_vmem [thread:$0]  %s323, 256, %s325, %s312, 256, 128, 8
        $region70: #{tpu_custom_call.1} parent=23 // pred_fallthru
          _
        // Predicated region
        $region71: #{tpu_custom_call.1} parent=23 // pred_check
          %p331 = pneg %p138
        $region72: #{tpu_custom_call.1} parent=23 // pred_check_branch
          %333 = sbr.rel (%p331) target = $region74
        $region73: #{tpu_custom_call.1} parent=23 // pred_region
          %s334 = sand.u32 %s20, 1
          %s335 = scalar_lea.sflag [#allocation8], %s334
          %s336 = sand.u32 %s128, 1
          %s337 = smul.addr %s336, 16
          %s338 = scalar_lea.vmem [#allocation9], %s337
          %s339 = smul.u32 2, %s27
          %s341 = ssub.s32 256, 256
          %342 = vsyncadd %s335, %s341
          %s343 = smul.addr %s339, 2
          %s344 = sadd.s32 %s28, %s343
          %s345 = smul.addr %s344, 128
          %s346 = scalar_lea.hbm %s3, %s345
          %s347 = sshll.u32 %s338, 4
          %s348 = int_to_ptr.vmem [resolvable:$true] %s347
          %353 = dma.hbm_to_vmem [thread:$0]  %s346, 256, %s348, %s335, 256, 128, 8
        $region74: #{tpu_custom_call.1} parent=23 // pred_fallthru
          _
      $region24: #{tpu_custom_call.1} parent=5 // pred_fallthru
        _
      %p354 = scmp.le.s32.totalorder 1, %s20
      %p355 = scmp.lt.s32.totalorder %s20, 3
      %p356 = pnand %p354, %p355
      %p357 = pneg %p356
      // Predicated region
      $region75: #{tpu_custom_call.1} parent=5 // pred_check
        _
      $region76: #{tpu_custom_call.1} parent=5 // pred_check_branch
        %359 = sbr.rel (%p356) target = $region78
      $region77: #{tpu_custom_call.1} parent=5 // pred_region
        %s360 = ssub.s32 %s20, 1
        %s361 = sand.u32 %s47, 1
        %s362 = sand.u32 %s47, 1
        %s363 = smul.addr %s362, 16
        %s364 = scalar_lea.vmem [#allocation4], %s363
        // Predicated region
        $region79: #{tpu_custom_call.1} parent=77 // pred_check
          %p365 = pneg %p60
        $region80: #{tpu_custom_call.1} parent=77 // pred_check_branch
          %367 = sbr.rel (%p365) target = $region82
        $region81: #{tpu_custom_call.1} parent=77 // pred_region
          _
        $region82: #{tpu_custom_call.1} parent=77 // pred_fallthru
          _
        %s368 = sand.u32 %s75, 1
        %s369 = scalar_lea.sflag [#allocation6], %s368
        %s370 = sand.u32 %s75, 1
        %s371 = smul.addr %s370, 16
        %s372 = scalar_lea.vmem [#allocation5], %s371
        // Predicated region
        $region83: #{tpu_custom_call.1} parent=77 // pred_check
          %p373 = pneg %p88
        $region84: #{tpu_custom_call.1} parent=77 // pred_check_branch
          %375 = sbr.rel (%p373) target = $region86
        $region85: #{tpu_custom_call.1} parent=77 // pred_region
          %376 = dma.done %s369, 256
        $region86: #{tpu_custom_call.1} parent=77 // pred_fallthru
          _
        %s377 = sand.u32 %s25, 1
        %s378 = scalar_lea.sflag [#allocation8], %s377
        %s379 = sand.u32 %s103, 1
        %s380 = smul.addr %s379, 16
        %s381 = scalar_lea.vmem [#allocation7], %s380
        // Predicated region
        $region87: #{tpu_custom_call.1} parent=77 // pred_check
          %p382 = pneg %p116
        $region88: #{tpu_custom_call.1} parent=77 // pred_check_branch
          %384 = sbr.rel (%p382) target = $region90
        $region89: #{tpu_custom_call.1} parent=77 // pred_region
          %385 = dma.done %s378, 256
        $region90: #{tpu_custom_call.1} parent=77 // pred_fallthru
          _
        %s386 = sand.u32 %s25, 1
        %s387 = scalar_lea.sflag [#allocation8], %s386
        %s388 = sand.u32 %s131, 1
        %s389 = smul.addr %s388, 16
        %s390 = scalar_lea.vmem [#allocation9], %s389
        // Predicated region
        $region91: #{tpu_custom_call.1} parent=77 // pred_check
          %p391 = pneg %p144
        $region92: #{tpu_custom_call.1} parent=77 // pred_check_branch
          %393 = sbr.rel (%p391) target = $region94
        $region93: #{tpu_custom_call.1} parent=77 // pred_region
          %394 = dma.done %s387, 256
        $region94: #{tpu_custom_call.1} parent=77 // pred_fallthru
          _
        %s395 = sand.u32 %s47, 1
        %s396 = sand.u32 %s47, 1
        %s397 = smul.addr %s396, 16
        %s398 = scalar_lea.vmem [#allocation4], %s397
        %p399 = pneg %p60
        %p400 = pneg %p57
        %s401 = sand.u32 %s75, 1
        %s402 = scalar_lea.sflag [#allocation6], %s401
        %s403 = sand.u32 %s75, 1
        %s404 = smul.addr %s403, 16
        %s405 = scalar_lea.vmem [#allocation5], %s404
        %p406 = pneg %p88
        %p407 = pneg %p85
        %s408 = sand.u32 %s25, 1
        %s409 = scalar_lea.sflag [#allocation8], %s408
        %s410 = sand.u32 %s103, 1
        %s411 = smul.addr %s410, 16
        %s412 = scalar_lea.vmem [#allocation7], %s411
        %p413 = pneg %p116
        %p414 = pneg %p113
        %s415 = sand.u32 %s25, 1
        %s416 = scalar_lea.sflag [#allocation8], %s415
        %s417 = sand.u32 %s131, 1
        %s418 = smul.addr %s417, 16
        %s419 = scalar_lea.vmem [#allocation9], %s418
        %p420 = pneg %p144
        %p421 = pneg %p141
        %p422 = pneg %p165
        %p423 = pneg %p162
        %p424 = pneg %p186
        %p425 = pneg %p183
        %p426 = pneg %p212
        %p427 = pneg %p209
        %p428 = scmp.lt.s32.totalorder %s29, 0
        %s429 = scalar_select %p428, %s29, 0
        %s430 = smul.addr %s429, 2
        %s431 = scalar_lea.vmem %s6, %s430
        %s432 = smul.u32 2, %s29
        %s433 = smul.u32 2, %s29
        %s434 = smul.u32 2, %s29
        %s435 = smul.u32 2, %s29
        %p436 = scmp.lt.s32.totalorder %s29, 0
        %s437 = scalar_select %p436, %s29, 0
        %s438 = smul.addr %s437, 2
        %s439 = scalar_lea.vmem %s6, %s438
        %p440 = scmp.eq.s32.totalorder %s30, 0
        // Predicated region
        $region95: #{tpu_custom_call.1} parent=77 // pred_check
          %p441 = pneg %p440
        $region96: #{tpu_custom_call.1} parent=77 // pred_check_branch
          %443 = sbr.rel (%p441) target = $region98
        $region97: #{tpu_custom_call.1} parent=77 // pred_region
          %vm444 = vcmask 254976
          %445 = vst.msk [vmem:[#allocation2] sm:$0x3] %vm444, 0.0
        $region98: #{tpu_custom_call.1} parent=77 // pred_fallthru
          _
        %v446 = vld [vmem:[%s364] sm:$0xff]
        %v447 = vld [vmem:[%s364 + $0x8] sm:$0xff]
        %v448 = vld [vmem:[%s372] sm:$0xff]
        %v449 = vld [vmem:[%s372 + $0x8] sm:$0xff]
        %v450 = vadd.f32 %v446, %v448
        %v451 = vadd.f32 %v447, %v449
        %v452 = vld [vmem:[%s381] sm:$0xff]
        %v453 = vld [vmem:[%s381 + $0x8] sm:$0xff]
        %v454 = vadd.f32 %v450, %v452
        %v455 = vadd.f32 %v451, %v453
        %v456 = vld [vmem:[%s390] sm:$0xff]
        %v457 = vld [vmem:[%s390 + $0x8] sm:$0xff]
        %v458 = vadd.f32 %v454, %v456
        %v459 = vadd.f32 %v455, %v457
        %v460 = vld [vmem:[#allocation2] sm:$0x3]
        %vm461 = vcmask 261120
        %v462 = vsel %vm461, %v458, 0.0
        %v463 = vrot.slane %v462, 4
        %v464 = vadd.f32 %v462, %v463
        %v465 = vrot.slane %v464, 2
        %v466 = vadd.f32 %v464, %v465
        %v467 = vrot.slane %v466, 1
        %v468 = vadd.f32 %v466, %v467
        %v469 = vsel %vm461, %v459, 0.0
        %v470 = vrot.slane %v469, 4
        %v471 = vadd.f32 %v469, %v470
        %v472 = vrot.slane %v471, 2
        %v473 = vadd.f32 %v471, %v472
        %v474 = vrot.slane %v473, 1
        %v475 = vadd.f32 %v473, %v474
        %vm478 = vcmask 1041409
        %v479 = vsel %vm478, %v475, %v468
        %v481 = vadd.f32 %v460, %v479
        %vm482 = vcmask 254976
        %483 = vst.msk [vmem:[#allocation2] sm:$0x3] %vm482, %v481
        %p484 = scmp.eq.s32.totalorder %s30, 1
        // Predicated region
        $region99: #{tpu_custom_call.1} parent=77 // pred_check
          %p485 = pneg %p484
        $region100: #{tpu_custom_call.1} parent=77 // pred_check_branch
          %487 = sbr.rel (%p485) target = $region102
        $region101: #{tpu_custom_call.1} parent=77 // pred_region
          %v488 = vld [vmem:[#allocation2] sm:$0x3]
          %v489 = vmul.f32 %v488, 0.015625
          %v490 = vld [vmem:[%s4] sm:$0xff]
          %v491 = vld [vmem:[%s4 + $0x8] sm:$0xff]
          %v492 = vld [vmem:[%s4 + $0x10] sm:$0xff]
          %v493 = vld [vmem:[%s4 + $0x18] sm:$0xff]
          %v494 = vld [vmem:[#allocation3] sm:$0x1]
          %v496 = vlaneseq
          %v497 = vshrl.u32 %v496, 7
          %v498 = vsub.s32 0, %v497
          %v499 = vrot.slane %v494, %v498
          %v502 = vsel %vm461, %v489, 0
          %504 = vmatprep.subr.mxu0 0.0
          %505 = vmatpush1.msra.mxu0 %v490
          %506 = vmatprep.subr.mxu0 0.0
          %507 = vmatpush1.msra.mxu0 %v491
          %508 = vmatprep.subr.mxu0 0.0
          %509 = vmatpush1.msra.mxu0 %v492
          %510 = vmatprep.subr.mxu0 0.0
          %511 = vmatpush1.msra.mxu0 %v493
          %512 = vmatprep.subr.mxu0 0.0
          %513 = vmatpush1.msra.mxu0 0.0
          %514 = vmatprep.subr.mxu0 0.0
          %515 = vmatpush1.msra.mxu0 0.0
          %516 = vmatprep.subr.mxu0 0.0
          %517 = vmatpush1.msra.mxu0 0.0
          %518 = vmatprep.subr.mxu0 0.0
          %519 = vmatpush1.msra.mxu0 0.0
          %520 = vmatprep.subr.mxu0 0.0
          %521 = vmatpush1.msra.mxu0 0.0
          %522 = vmatprep.subr.mxu0 0.0
          %523 = vmatpush1.msra.mxu0 0.0
          %524 = vmatprep.subr.mxu0 0.0
          %525 = vmatpush1.msra.mxu0 0.0
          %526 = vmatprep.subr.mxu0 0.0
          %527 = vmatpush1.msra.mxu0 0.0
          %528 = vmatprep.subr.mxu0 0.0
          %529 = vmatpush1.msra.mxu0 0.0
          %530 = vmatprep.subr.mxu0 0.0
          %531 = vmatpush1.msra.mxu0 0.0
          %532 = vmatprep.subr.mxu0 0.0
          %533 = vmatpush1.msra.mxu0 0.0
          %534 = vmatprep.subr.mxu0 0.0
          %535 = vmatpush1.msra.mxu0 0.0
          %536 = vmatprep.subr.mxu0 0.0
          %537 = vmatpush1.msra.mxu0 0.0
          %538 = vmatprep.subr.mxu0 0.0
          %539 = vmatpush1.msra.mxu0 0.0
          %540 = vmatprep.subr.mxu0 0.0
          %541 = vmatpush1.msra.mxu0 0.0
          %542 = vmatprep.subr.mxu0 0.0
          %543 = vmatpush1.msra.mxu0 0.0
          %544 = vmatprep.subr.mxu0 0.0
          %545 = vmatpush1.msra.mxu0 0.0
          %546 = vmatprep.subr.mxu0 0.0
          %547 = vmatpush1.msra.mxu0 0.0
          %548 = vmatprep.subr.mxu0 0.0
          %549 = vmatpush1.msra.mxu0 0.0
          %550 = vmatprep.subr.mxu0 0.0
          %551 = vmatpush1.msra.mxu0 0.0
          %552 = vmatprep.subr.mxu0 0.0
          %553 = vmatpush1.msra.mxu0 0.0
          %554 = vmatprep.subr.mxu0 0.0
          %555 = vmatpush1.msra.mxu0 0.0
          %556 = vmatprep.subr.mxu0 0.0
          %557 = vmatpush1.msra.mxu0 0.0
          %558 = vmatprep.subr.mxu0 0.0
          %559 = vmatpush1.msra.mxu0 0.0
          %560 = vmatprep.subr.mxu0 0.0
          %561 = vmatpush1.msra.mxu0 0.0
          %562 = vmatprep.subr.mxu0 0.0
          %563 = vmatpush1.msra.mxu0 0.0
          %564 = vmatprep.subr.mxu0 0.0
          %565 = vmatpush1.msra.mxu0 0.0
          %566 = vmatprep.subr.mxu0 0.0
          %567 = vmatpush1.msra.mxu0 0.0
          %568 = vmatprep.mubr.f32.mxu0 0.0
          %569 = vmatmul.mubr.f32.gmra.mrb[0].mxu0 %v502
          %v570 = vpop.f32.mrb[0].mxu0
          %v571 = vadd.f32 %v499, %v570
          %v572 = vpop.f32.mrb[0].mxu0
          %573 = vdwg.mxu0
          %vm574 = vcmask 1024
          %575 = vst.msk [vmem:[%s439] sm:$0x3] %vm574, %v571
        $region102: #{tpu_custom_call.1} parent=77 // pred_fallthru
          _
        %p576 = scmp.lt.s32.totalorder %s29, 0
        %s577 = scalar_select %p576, %s29, 0
        %s578 = smul.addr %s577, 2
        %s579 = scalar_lea.vmem %s6, %s578
        // Predicated region
        $region103: #{tpu_custom_call.1} parent=77 // pred_check
          %p580 = pneg %p209
        $region104: #{tpu_custom_call.1} parent=77 // pred_check_branch
          %582 = sbr.rel (%p580) target = $region106
        $region105: #{tpu_custom_call.1} parent=77 // pred_region
          _
        $region106: #{tpu_custom_call.1} parent=77 // pred_fallthru
          _
        // Predicated region
        $region107: #{tpu_custom_call.1} parent=77 // pred_check
          %p583 = pneg %p209
        $region108: #{tpu_custom_call.1} parent=77 // pred_check_branch
          %585 = sbr.rel (%p583) target = $region110
        $region109: #{tpu_custom_call.1} parent=77 // pred_region
          %p586 = scmp.lt.s32.totalorder %s29, 0
          %s587 = scalar_select %p586, %s29, 0
          %s588 = smul.addr %s587, 2
          %s589 = scalar_lea.vmem %s6, %s588
        $region110: #{tpu_custom_call.1} parent=77 // pred_fallthru
          _
      $region78: #{tpu_custom_call.1} parent=5 // pred_fallthru
        _
      %p590 = scmp.le.s32.totalorder 2, %s20
      // Predicated region
      $region111: #{tpu_custom_call.1} parent=5 // pred_check
        %p591 = pneg %p590
      $region112: #{tpu_custom_call.1} parent=5 // pred_check_branch
        %593 = sbr.rel (%p591) target = $region114
      $region113: #{tpu_custom_call.1} parent=5 // pred_region
        %s594 = ssub.s32 %s20, 2
      $region114: #{tpu_custom_call.1} parent=5 // pred_fallthru
        _
    $region6: #{tpu_custom_call.1} parent=1 // loop_footer
      %s24 = sadd.s32 1, %s20
    $region7: #{tpu_custom_call.1} parent=1 // loop_footer_branch
      %19 = sbr.rel target = $region3
    $region8: #{tpu_custom_call.1} parent=1 // loop_exit
      _
    %595 = vsyncpa [#allocation6], 1
    %s596 = scalar_lea.sflag [#allocation6], 1
    %597 = vsyncpa %s596, 1
    %598 = vsyncpa [#allocation8], 1
    %s599 = scalar_lea.sflag [#allocation8], 1
    %600 = vsyncpa %s599, 1

</llo_original>
